<compile_context>
chip_gen: v5e
topology: v5e:2x2
jax: 0.10.0
libtpu: 0.0.40
codegen_flags: <defaults>
</compile_context>

<pallas_src>
import jax
import jax.numpy as jnp
from jax import lax
from jax.experimental import pallas as pl
from jax.experimental.pallas import tpu as pltpu

SIDE = 8
IN_DIM = SIDE * SIDE * 2   # 128 input features
OUT_DIM = SIDE * SIDE      # 64 real output features
OUT_PAD = 128              # lane-dense padded output width


def _round_up(n, m):
    return ((n + m - 1) // m) * m


def dqn_kernel(x_ref, w0_ref, b0_ref, wA_ref, bA_ref, wB_ref, bB_ref,
               wL_ref, bL_ref, o_ref):
    # Cast x in-kernel (cheap VPU op hidden under the first matmul).
    x = x_ref[...].astype(jnp.bfloat16)

    # first_layer: Linear(IN_DIM, H) + ReLU  (bf16 MXU operands, f32 accum)
    h = jnp.dot(x, w0_ref[...], preferred_element_type=jnp.float32)
    h = jnp.maximum(h + b0_ref[...], 0.0)

    # middle_layers: num_blocks x Linear_skip_block
    #   relu(x + Linear(relu(Linear(x))))
    num_blocks = wA_ref.shape[0]  # compile-time constant

    def block_body(k, h):
        t = jnp.dot(h.astype(jnp.bfloat16), wA_ref[k],
                    preferred_element_type=jnp.float32)
        t = jnp.maximum(t + bA_ref[k], 0.0)
        t = jnp.dot(t.astype(jnp.bfloat16), wB_ref[k],
                    preferred_element_type=jnp.float32) + bB_ref[k]
        return jnp.maximum(h + t, 0.0)

    if num_blocks >= 8:
        # Bounded-unroll loop keeps the scheduler window / vreg pressure tight.
        h = lax.fori_loop(0, num_blocks, block_body, h, unroll=2)
    else:
        for k in range(num_blocks):
            h = block_body(k, h)

    # last_layer: Linear(H, OUT_PAD) (zero-padded columns), no activation.
    out = jnp.dot(h.astype(jnp.bfloat16), wL_ref[...],
                  preferred_element_type=jnp.float32) + bL_ref[...]
    o_ref[...] = out.astype(o_ref.dtype)


def reversi_dqn_forward(x, w0, b0, wA, bA, wB, bB, wL, bL, *, tile_b=None):
    B, in_dim = x.shape
    H = w0.shape[1]
    nb = wA.shape[0]
    assert in_dim == IN_DIM
    assert H % 128 == 0, "hidden width must be a multiple of 128 lanes"

    # Pad final layer to 128 output lanes (lane-dense, unmasked stores).
    wL_p = jnp.zeros((H, OUT_PAD), jnp.float32).at[:, :OUT_DIM].set(wL)
    bL_p = jnp.zeros((1, OUT_PAD), jnp.float32).at[:, :OUT_DIM].set(bL)

    # --- batch tiling -------------------------------------------------------
    # Big tiles amortize the ~0.35us per-grid-step overhead; 16-row alignment
    # gives clean bf16 (16,128) packing.
    if tile_b is None:
        tile_b = 1024 if H <= 512 else 512
    b16 = _round_up(max(B, 16), 16)
    tile_b = max(16, _round_up(min(tile_b, b16), 16))
    # Prefer >= 2 grid steps when the batch allows it (v7x has 2 TensorCores).
    if b16 >= 32 and tile_b >= b16:
        tile_b = _round_up((b16 + 1) // 2, 16)
    b_pad = _round_up(b16, tile_b)
    x_p = x if b_pad == B else jnp.pad(x, ((0, b_pad - B), (0, 0)))

    # bf16 for MXU weight operands; biases / elementwise work stay f32
    # (keeps the v5e VPU path valid).
    bf16 = jnp.bfloat16
    w0b, wAb, wBb, wLb = (w0.astype(bf16), wA.astype(bf16),
                          wB.astype(bf16), wL_p.astype(bf16))
    b0f, bAf, bBf, bLf = (b0.astype(jnp.float32), bA.astype(jnp.float32),
                          bB.astype(jnp.float32), bL_p.astype(jnp.float32))

    grid = (b_pad // tile_b,)

    # --- cost estimate / VMEM budget ---------------------------------------
    weight_bytes = (IN_DIM * H + 2 * nb * H * H + H * OUT_PAD) * 2
    bias_bytes = (H + 2 * nb * H + OUT_PAD) * 4
    flops = 2 * b_pad * (IN_DIM * H + 2 * nb * H * H + H * OUT_PAD)
    bytes_accessed = (x_p.size * 4 + b_pad * OUT_PAD * 4
                      + weight_bytes + bias_bytes)

    vmem_bytes = (2 * tile_b * IN_DIM * 4        # x tile, f32, double-buffered
                  + 2 * tile_b * OUT_PAD * 4     # out tile, f32, double-buffered
                  + weight_bytes + bias_bytes    # single-buffered weights/biases
                  + 4 * tile_b * H * 4)          # f32 / bf16 intermediates
    vmem_bytes = int(vmem_bytes * 1.5) + (4 << 20)
    vmem_bytes = max(16 << 20, min(vmem_bytes, 48 << 20))  # safe on v5e..v7x

    # Constant-index weight/bias blocks: single-buffer (no wasted 2x VMEM).
    def const_spec(shape):
        return pl.BlockSpec(shape, lambda i: (0,) * len(shape),
                            pipeline_mode=pl.Buffered(1))

    out = pl.pallas_call(
        dqn_kernel,
        out_shape=jax.ShapeDtypeStruct((b_pad, OUT_PAD), jnp.float32),
        grid=grid,
        in_specs=[
            pl.BlockSpec((tile_b, IN_DIM), lambda i: (i, 0)),  # x: tiled over batch
            const_spec((IN_DIM, H)),                           # w0: VMEM-resident
            const_spec((1, H)),                                # b0
            const_spec((nb, H, H)),                            # wA
            const_spec((nb, 1, H)),                            # bA
            const_spec((nb, H, H)),                            # wB
            const_spec((nb, 1, H)),                            # bB
            const_spec((H, OUT_PAD)),                          # wL (padded)
            const_spec((1, OUT_PAD)),                          # bL (padded)
        ],
        out_specs=pl.BlockSpec((tile_b, OUT_PAD), lambda i: (i, 0)),
        compiler_params=pltpu.CompilerParams(
            dimension_semantics=("parallel",),
            vmem_limit_bytes=vmem_bytes),
        cost_estimate=pl.CostEstimate(flops=flops,
                                      transcendentals=0,
                                      bytes_accessed=bytes_accessed),
    )(x_p, w0b, b0f, wAb, bAf, wBb, bBf, wLb, bLf)

    return out[:B, :OUT_DIM]


def reference_forward(x, w0, b0, wA, bA, wB, bB, wL, bL):
    # Pure-JAX reference with the same bf16-operand / f32-accumulate matmuls.
    def mm(a, w):
        return jnp.dot(a.astype(jnp.bfloat16), w.astype(jnp.bfloat16),
                       preferred_element_type=jnp.float32)

    h = jnp.maximum(mm(x, w0) + b0, 0.0)
    for k in range(wA.shape[0]):
        t = jnp.maximum(mm(h, wA[k]) + bA[k], 0.0)
        t = mm(t, wB[k]) + bB[k]
        h = jnp.maximum(h + t, 0.0)
    return mm(h, wL) + bL


if __name__ == "__main__":
    num_blocks = 2
    hidden = 128
    batch = 8

    key = jax.random.PRNGKey(0)
    keys = jax.random.split(key, 10)

    # Deterministic synthetic parameters (shapes match the PyTorch module,
    # weights pre-transposed to (in, out)).
    x = jax.random.normal(keys[0], (batch, IN_DIM), dtype=jnp.float32)

    w0 = jax.random.normal(keys[1], (IN_DIM, hidden), jnp.float32) * 0.05
    b0 = jax.random.normal(keys[2], (1, hidden), jnp.float32) * 0.05

    wA = jax.random.normal(keys[3], (num_blocks, hidden, hidden), jnp.float32) * 0.05
    bA = jax.random.normal(keys[4], (num_blocks, 1, hidden), jnp.float32) * 0.05
    wB = jax.random.normal(keys[5], (num_blocks, hidden, hidden), jnp.float32) * 0.05
    bB = jax.random.normal(keys[6], (num_blocks, 1, hidden), jnp.float32) * 0.05

    wL = jax.random.normal(keys[7], (hidden, OUT_DIM), jnp.float32) * 0.05
    bL = jax.random.normal(keys[8], (1, OUT_DIM), jnp.float32) * 0.05

    out = reversi_dqn_forward(x, w0, b0, wA, bA, wB, bB, wL, bL)
    out = jax.block_until_ready(out)

    ref = reference_forward(x, w0, b0[0], wA, bA[:, 0], wB, bB[:, 0], wL, bL[0])
    assert out.shape == (batch, OUT_DIM)
    assert jnp.allclose(out, ref, atol=1e-2, rtol=1e-2), "mismatch vs JAX reference"

    print("KERNEL_OK")
</pallas_src>

<mosaic_0001>
module attributes {stable_mosaic.version = 11 : i64} {
  func.func @dqn_kernel(%arg0: i32, %arg1: memref<16x128xf32, #tpu.memory_space<vmem>>, %arg2: memref<128x128xbf16, #tpu.memory_space<vmem>>, %arg3: memref<1x128xf32, #tpu.memory_space<vmem>>, %arg4: memref<2x128x128xbf16, #tpu.memory_space<vmem>>, %arg5: memref<2x1x128xf32, #tpu.memory_space<vmem>>, %arg6: memref<2x128x128xbf16, #tpu.memory_space<vmem>>, %arg7: memref<2x1x128xf32, #tpu.memory_space<vmem>>, %arg8: memref<128x128xbf16, #tpu.memory_space<vmem>>, %arg9: memref<1x128xf32, #tpu.memory_space<vmem>>, %arg10: memref<16x128xf32, #tpu.memory_space<vmem>>) attributes {dimension_semantics = [#tpu.dimension_semantics<parallel>], iteration_bounds = array<i64: 1>, scalar_prefetch = 0 : i64, scratch_operands = 0 : i64, tpu.core_type = #tpu.core_type<tc>, window_params = [{transform_indices = @transform_0, window_bounds = array<i64: 16, 128>}, {pipeline_mode = #tpu.pipeline_mode<synchronous>, transform_indices = @transform_1, window_bounds = array<i64: 128, 128>}, {pipeline_mode = #tpu.pipeline_mode<synchronous>, transform_indices = @transform_2, window_bounds = array<i64: 1, 128>}, {pipeline_mode = #tpu.pipeline_mode<synchronous>, transform_indices = @transform_3, window_bounds = array<i64: 2, 128, 128>}, {pipeline_mode = #tpu.pipeline_mode<synchronous>, transform_indices = @transform_4, window_bounds = array<i64: 2, 1, 128>}, {pipeline_mode = #tpu.pipeline_mode<synchronous>, transform_indices = @transform_5, window_bounds = array<i64: 2, 128, 128>}, {pipeline_mode = #tpu.pipeline_mode<synchronous>, transform_indices = @transform_6, window_bounds = array<i64: 2, 1, 128>}, {pipeline_mode = #tpu.pipeline_mode<synchronous>, transform_indices = @transform_7, window_bounds = array<i64: 128, 128>}, {pipeline_mode = #tpu.pipeline_mode<synchronous>, transform_indices = @transform_8, window_bounds = array<i64: 1, 128>}, {transform_indices = @transform_9, window_bounds = array<i64: 16, 128>}]} {
    %c0 = arith.constant 0 : index
    %c0_0 = arith.constant 0 : index
    %0 = vector.load %arg1[%c0, %c0_0] : memref<16x128xf32, #tpu.memory_space<vmem>>, vector<16x128xf32>
    %1 = arith.truncf %0 : vector<16x128xf32> to vector<16x128xbf16>
    %c0_1 = arith.constant 0 : index
    %c0_2 = arith.constant 0 : index
    %2 = vector.load %arg2[%c0_1, %c0_2] : memref<128x128xbf16, #tpu.memory_space<vmem>>, vector<128x128xbf16>
    %cst = arith.constant dense<0.000000e+00> : vector<16x128xf32>
    %3 = tpu.matmul %1, %2, %cst {dimension_numbers = #tpu.dot_dimension_numbers<[1], [0], [0], [1], [0, 0, 1, 1], [], []>} : vector<16x128xbf16>, vector<128x128xbf16>, vector<16x128xf32> -> vector<16x128xf32>
    %c0_3 = arith.constant 0 : index
    %c0_4 = arith.constant 0 : index
    %4 = vector.load %arg3[%c0_3, %c0_4] : memref<1x128xf32, #tpu.memory_space<vmem>>, vector<1x128xf32>
    %5 = vector.broadcast %4 : vector<1x128xf32> to vector<16x128xf32>
    %6 = arith.addf %3, %5 : vector<16x128xf32>
    %cst_5 = arith.constant 0.000000e+00 : f32
    %7 = vector.broadcast %cst_5 : f32 to vector<16x128xf32>
    %8 = arith.maximumf %6, %7 : vector<16x128xf32>
    %9 = arith.truncf %8 : vector<16x128xf32> to vector<16x128xbf16>
    %c0_6 = arith.constant 0 : index
    %c0_7 = arith.constant 0 : index
    %c0_8 = arith.constant 0 : index
    %10 = vector.load %arg4[%c0_6, %c0_7, %c0_8] : memref<2x128x128xbf16, #tpu.memory_space<vmem>>, vector<1x128x128xbf16>
    %11 = vector.shape_cast %10 : vector<1x128x128xbf16> to vector<128x128xbf16>
    %cst_9 = arith.constant dense<0.000000e+00> : vector<16x128xf32>
    %12 = tpu.matmul %9, %11, %cst_9 {dimension_numbers = #tpu.dot_dimension_numbers<[1], [0], [0], [1], [0, 0, 1, 1], [], []>} : vector<16x128xbf16>, vector<128x128xbf16>, vector<16x128xf32> -> vector<16x128xf32>
    %c0_10 = arith.constant 0 : index
    %c0_11 = arith.constant 0 : index
    %c0_12 = arith.constant 0 : index
    %13 = vector.load %arg5[%c0_10, %c0_11, %c0_12] : memref<2x1x128xf32, #tpu.memory_space<vmem>>, vector<1x1x128xf32>
    %14 = vector.shape_cast %13 : vector<1x1x128xf32> to vector<1x128xf32>
    %15 = vector.broadcast %14 : vector<1x128xf32> to vector<16x128xf32>
    %16 = arith.addf %12, %15 : vector<16x128xf32>
    %cst_13 = arith.constant 0.000000e+00 : f32
    %17 = vector.broadcast %cst_13 : f32 to vector<16x128xf32>
    %18 = arith.maximumf %16, %17 : vector<16x128xf32>
    %19 = arith.truncf %18 : vector<16x128xf32> to vector<16x128xbf16>
    %c0_14 = arith.constant 0 : index
    %c0_15 = arith.constant 0 : index
    %c0_16 = arith.constant 0 : index
    %20 = vector.load %arg6[%c0_14, %c0_15, %c0_16] : memref<2x128x128xbf16, #tpu.memory_space<vmem>>, vector<1x128x128xbf16>
    %21 = vector.shape_cast %20 : vector<1x128x128xbf16> to vector<128x128xbf16>
    %cst_17 = arith.constant dense<0.000000e+00> : vector<16x128xf32>
    %22 = tpu.matmul %19, %21, %cst_17 {dimension_numbers = #tpu.dot_dimension_numbers<[1], [0], [0], [1], [0, 0, 1, 1], [], []>} : vector<16x128xbf16>, vector<128x128xbf16>, vector<16x128xf32> -> vector<16x128xf32>
    %c0_18 = arith.constant 0 : index
    %c0_19 = arith.constant 0 : index
    %c0_20 = arith.constant 0 : index
    %23 = vector.load %arg7[%c0_18, %c0_19, %c0_20] : memref<2x1x128xf32, #tpu.memory_space<vmem>>, vector<1x1x128xf32>
    %24 = vector.shape_cast %23 : vector<1x1x128xf32> to vector<1x128xf32>
    %25 = vector.broadcast %24 : vector<1x128xf32> to vector<16x128xf32>
    %26 = arith.addf %22, %25 : vector<16x128xf32>
    %27 = arith.addf %8, %26 : vector<16x128xf32>
    %cst_21 = arith.constant 0.000000e+00 : f32
    %28 = vector.broadcast %cst_21 : f32 to vector<16x128xf32>
    %29 = arith.maximumf %27, %28 : vector<16x128xf32>
    %30 = arith.truncf %29 : vector<16x128xf32> to vector<16x128xbf16>
    %c1 = arith.constant 1 : index
    %c0_22 = arith.constant 0 : index
    %c0_23 = arith.constant 0 : index
    %31 = vector.load %arg4[%c1, %c0_22, %c0_23] : memref<2x128x128xbf16, #tpu.memory_space<vmem>>, vector<1x128x128xbf16>
    %32 = vector.shape_cast %31 : vector<1x128x128xbf16> to vector<128x128xbf16>
    %cst_24 = arith.constant dense<0.000000e+00> : vector<16x128xf32>
    %33 = tpu.matmul %30, %32, %cst_24 {dimension_numbers = #tpu.dot_dimension_numbers<[1], [0], [0], [1], [0, 0, 1, 1], [], []>} : vector<16x128xbf16>, vector<128x128xbf16>, vector<16x128xf32> -> vector<16x128xf32>
    %c1_25 = arith.constant 1 : index
    %c0_26 = arith.constant 0 : index
    %c0_27 = arith.constant 0 : index
    %34 = vector.load %arg5[%c1_25, %c0_26, %c0_27] : memref<2x1x128xf32, #tpu.memory_space<vmem>>, vector<1x1x128xf32>
    %35 = vector.shape_cast %34 : vector<1x1x128xf32> to vector<1x128xf32>
    %36 = vector.broadcast %35 : vector<1x128xf32> to vector<16x128xf32>
    %37 = arith.addf %33, %36 : vector<16x128xf32>
    %cst_28 = arith.constant 0.000000e+00 : f32
    %38 = vector.broadcast %cst_28 : f32 to vector<16x128xf32>
    %39 = arith.maximumf %37, %38 : vector<16x128xf32>
    %40 = arith.truncf %39 : vector<16x128xf32> to vector<16x128xbf16>
    %c1_29 = arith.constant 1 : index
    %c0_30 = arith.constant 0 : index
    %c0_31 = arith.constant 0 : index
    %41 = vector.load %arg6[%c1_29, %c0_30, %c0_31] : memref<2x128x128xbf16, #tpu.memory_space<vmem>>, vector<1x128x128xbf16>
    %42 = vector.shape_cast %41 : vector<1x128x128xbf16> to vector<128x128xbf16>
    %cst_32 = arith.constant dense<0.000000e+00> : vector<16x128xf32>
    %43 = tpu.matmul %40, %42, %cst_32 {dimension_numbers = #tpu.dot_dimension_numbers<[1], [0], [0], [1], [0, 0, 1, 1], [], []>} : vector<16x128xbf16>, vector<128x128xbf16>, vector<16x128xf32> -> vector<16x128xf32>
    %c1_33 = arith.constant 1 : index
    %c0_34 = arith.constant 0 : index
    %c0_35 = arith.constant 0 : index
    %44 = vector.load %arg7[%c1_33, %c0_34, %c0_35] : memref<2x1x128xf32, #tpu.memory_space<vmem>>, vector<1x1x128xf32>
    %45 = vector.shape_cast %44 : vector<1x1x128xf32> to vector<1x128xf32>
    %46 = vector.broadcast %45 : vector<1x128xf32> to vector<16x128xf32>
    %47 = arith.addf %43, %46 : vector<16x128xf32>
    %48 = arith.addf %29, %47 : vector<16x128xf32>
    %cst_36 = arith.constant 0.000000e+00 : f32
    %49 = vector.broadcast %cst_36 : f32 to vector<16x128xf32>
    %50 = arith.maximumf %48, %49 : vector<16x128xf32>
    %51 = arith.truncf %50 : vector<16x128xf32> to vector<16x128xbf16>
    %c0_37 = arith.constant 0 : index
    %c0_38 = arith.constant 0 : index
    %52 = vector.load %arg8[%c0_37, %c0_38] : memref<128x128xbf16, #tpu.memory_space<vmem>>, vector<128x128xbf16>
    %cst_39 = arith.constant dense<0.000000e+00> : vector<16x128xf32>
    %53 = tpu.matmul %51, %52, %cst_39 {dimension_numbers = #tpu.dot_dimension_numbers<[1], [0], [0], [1], [0, 0, 1, 1], [], []>} : vector<16x128xbf16>, vector<128x128xbf16>, vector<16x128xf32> -> vector<16x128xf32>
    %c0_40 = arith.constant 0 : index
    %c0_41 = arith.constant 0 : index
    %54 = vector.load %arg9[%c0_40, %c0_41] : memref<1x128xf32, #tpu.memory_space<vmem>>, vector<1x128xf32>
    %55 = vector.broadcast %54 : vector<1x128xf32> to vector<16x128xf32>
    %56 = arith.addf %53, %55 : vector<16x128xf32>
    %c0_42 = arith.constant 0 : index
    %c0_43 = arith.constant 0 : index
    %57 = vector.load %arg10[%c0_42, %c0_43] : memref<16x128xf32, #tpu.memory_space<vmem>>, vector<16x128xf32>
    tpu.vector_store %arg10[%c0_42, %c0_43], %56 {strides = array<i32>} : memref<16x128xf32, #tpu.memory_space<vmem>>, vector<16x128xf32>,
    return
  }
  func.func @transform_0(%arg0: i32) -> (i32, i32) {
    %c0_i32 = arith.constant 0 : i32
    %c0_i32_0 = arith.constant 0 : i32
    return %arg0, %c0_i32 : i32, i32
  }
  func.func @transform_1(%arg0: i32) -> (i32, i32) {
    %c0_i32 = arith.constant 0 : i32
    %c0_i32_0 = arith.constant 0 : i32
    %c0_i32_1 = arith.constant 0 : i32
    return %c0_i32, %c0_i32_0 : i32, i32
  }
  func.func @transform_2(%arg0: i32) -> (i32, i32) {
    %c0_i32 = arith.constant 0 : i32
    %c0_i32_0 = arith.constant 0 : i32
    %c0_i32_1 = arith.constant 0 : i32
    return %c0_i32, %c0_i32_0 : i32, i32
  }
  func.func @transform_3(%arg0: i32) -> (i32, i32, i32) {
    %c0_i32 = arith.constant 0 : i32
    %c0_i32_0 = arith.constant 0 : i32
    %c0_i32_1 = arith.constant 0 : i32
    %c0_i32_2 = arith.constant 0 : i32
    return %c0_i32, %c0_i32_0, %c0_i32_1 : i32, i32, i32
  }
  func.func @transform_4(%arg0: i32) -> (i32, i32, i32) {
    %c0_i32 = arith.constant 0 : i32
    %c0_i32_0 = arith.constant 0 : i32
    %c0_i32_1 = arith.constant 0 : i32
    %c0_i32_2 = arith.constant 0 : i32
    return %c0_i32, %c0_i32_0, %c0_i32_1 : i32, i32, i32
  }
  func.func @transform_5(%arg0: i32) -> (i32, i32, i32) {
    %c0_i32 = arith.constant 0 : i32
    %c0_i32_0 = arith.constant 0 : i32
    %c0_i32_1 = arith.constant 0 : i32
    %c0_i32_2 = arith.constant 0 : i32
    return %c0_i32, %c0_i32_0, %c0_i32_1 : i32, i32, i32
  }
  func.func @transform_6(%arg0: i32) -> (i32, i32, i32) {
    %c0_i32 = arith.constant 0 : i32
    %c0_i32_0 = arith.constant 0 : i32
    %c0_i32_1 = arith.constant 0 : i32
    %c0_i32_2 = arith.constant 0 : i32
    return %c0_i32, %c0_i32_0, %c0_i32_1 : i32, i32, i32
  }
  func.func @transform_7(%arg0: i32) -> (i32, i32) {
    %c0_i32 = arith.constant 0 : i32
    %c0_i32_0 = arith.constant 0 : i32
    %c0_i32_1 = arith.constant 0 : i32
    return %c0_i32, %c0_i32_0 : i32, i32
  }
  func.func @transform_8(%arg0: i32) -> (i32, i32) {
    %c0_i32 = arith.constant 0 : i32
    %c0_i32_0 = arith.constant 0 : i32
    %c0_i32_1 = arith.constant 0 : i32
    return %c0_i32, %c0_i32_0 : i32, i32
  }
  func.func @transform_9(%arg0: i32) -> (i32, i32) {
    %c0_i32 = arith.constant 0 : i32
    %c0_i32_0 = arith.constant 0 : i32
    return %arg0, %c0_i32 : i32, i32
  }
}

</mosaic_0001>

<llo_original>
// kernel: tpu_custom_call.1
$region0: #{tpu_custom_call.1}
  #allocation0 [shape = 'u32[]', space=smem, size = 0x4, offset = 0x4, fixed_abs, tag = 'smem constant byte address 0x4 - core index']
  #allocation1 [shape = 'u32[72,128]{1,0:T(1,128)}', space=vmem, size = 0x9000, scoped, tag = 'internal scratch']
  %s0 = inlined_call_operand.hbm [shape: f32[16,128], index: 0, kind: input, shape index: {}]
  %s1 = inlined_call_operand.hbm [shape: bf16[128,128], index: 1, kind: input, shape index: {}]
  %s2 = inlined_call_operand.hbm [shape: f32[1,128], index: 2, kind: input, shape index: {}]
  %s3 = inlined_call_operand.hbm [shape: bf16[2,128,128], index: 3, kind: input, shape index: {}]
  %s4 = inlined_call_operand.vmem [shape: f32[2,1,128], index: 4, kind: input, shape index: {}]
  %s5 = inlined_call_operand.hbm [shape: bf16[2,128,128], index: 5, kind: input, shape index: {}]
  %s6 = inlined_call_operand.vmem [shape: f32[2,1,128], index: 6, kind: input, shape index: {}]
  %s7 = inlined_call_operand.hbm [shape: bf16[128,128], index: 7, kind: input, shape index: {}]
  %s8 = inlined_call_operand.vmem [shape: f32[1,128], index: 8, kind: input, shape index: {}]
  %s9 = inlined_call_operand.hbm [shape: f32[16,128], index: 9, kind: output, shape index: {}]
  %s10 = sld [smem:[#allocation0]]
  $region70: #{tpu_custom_call.1} parent=0
    _
  %s12 = ssub.s32 1, %s10
  %s13 = scalar_select 0, %s12, %s10
  $region1: #{tpu_custom_call.1} parent=0
    #allocation2 [shape = 'u8[8192]{0}', space=vmem, size = 0x2000, scoped, tag = 'input window, operand 0, single buffered']
    #allocation3 [shape = 's32[1]{0}', space=sflag, size = 0x4, scoped, tag = 'scoped memory for tpu_custom_call.1']
    #allocation4 [shape = 's32[1]{0}', space=sflag, size = 0x4, scoped, tag = 'scoped memory for tpu_custom_call.1']
    #allocation5 [shape = 'u8[32768]{0}', space=vmem, size = 0x8000, scoped, tag = 'input window, operand 1, single buffered']
    #allocation6 [shape = 's32[1]{0}', space=sflag, size = 0x4, scoped, tag = 'scoped memory for tpu_custom_call.1']
    #allocation7 [shape = 'u8[512]{0}', space=vmem, size = 0x400, scoped, tag = 'input window, operand 2, single buffered']
    #allocation8 [shape = 'u8[65536]{0}', space=vmem, size = 0x10000, scoped, tag = 'input window, operand 3, single buffered']
    #allocation9 [shape = 's32[1]{0}', space=sflag, size = 0x4, scoped, tag = 'scoped memory for tpu_custom_call.1']
    #allocation10 [shape = 'u8[65536]{0}', space=vmem, size = 0x10000, scoped, tag = 'input window, operand 5, single buffered']
    #allocation11 [shape = 'u8[32768]{0}', space=vmem, size = 0x8000, scoped, tag = 'input window, operand 7, single buffered']
    #allocation12 [shape = 's32[1]{0}', space=sflag, size = 0x4, scoped, tag = 'scoped memory for tpu_custom_call.1']
    #allocation13 [shape = 'u8[8192]{0}', space=vmem, size = 0x2000, scoped, tag = 'output window, operand 0, single buffered']
    %14 = vsyncpa [#allocation3], 0
    %15 = vsyncpa [#allocation6], 0
    %16 = vsyncpa [#allocation9], 0
    %17 = vsyncpa [#allocation12], 0
    %18 = vsyncpa [#allocation4], 0
    // Predicated region
    $region2: #{tpu_custom_call.1} parent=1 // pred_check
      _
    $region3: #{tpu_custom_call.1} parent=1 // pred_check_branch
      %20 = sbr.rel (0) target = $region5
    $region4: #{tpu_custom_call.1} parent=1 // pred_region
      %22 = vsyncadd [#allocation3], 0
      %s23 = sshll.u32 %s0, 4
      %s24 = int_to_ptr.hbm [resolvable:$true] %s23
      %s25 = sshll.u32 [#allocation2], 4
      %s26 = int_to_ptr.vmem [resolvable:$true] %s25
      %31 = dma.hbm_to_vmem [thread:$0]  %s24, 256, %s26, [#allocation3], 128, 128, 8
    $region5: #{tpu_custom_call.1} parent=1 // pred_fallthru
      _
    // Predicated region
    $region6: #{tpu_custom_call.1} parent=1 // pred_check
      _
    $region7: #{tpu_custom_call.1} parent=1 // pred_check_branch
      %33 = sbr.rel (0) target = $region9
    $region8: #{tpu_custom_call.1} parent=1 // pred_region
      %35 = vsyncadd [#allocation6], 0
      %s36 = sshll.u32 %s1, 4
      %s37 = int_to_ptr.hbm [resolvable:$true] %s36
      %s38 = sshll.u32 [#allocation5], 4
      %s39 = int_to_ptr.vmem [resolvable:$true] %s38
      %44 = dma.hbm_to_vmem [thread:$0]  %s37, 1024, %s39, [#allocation6], 64, 64, 4
    $region9: #{tpu_custom_call.1} parent=1 // pred_fallthru
      _
    // Predicated region
    $region10: #{tpu_custom_call.1} parent=1 // pred_check
      _
    $region11: #{tpu_custom_call.1} parent=1 // pred_check_branch
      %46 = sbr.rel (0) target = $region13
    $region12: #{tpu_custom_call.1} parent=1 // pred_region
      %48 = vsyncadd [#allocation6], 0
      %s50 = sshll.u32 %s2, 4
      %s51 = int_to_ptr.hbm [resolvable:$true] %s50
      %s52 = sshll.u32 [#allocation7], 4
      %s53 = int_to_ptr.vmem [resolvable:$true] %s52
      %55 = dma.hbm_to_vmem [thread:$0]  %s51, 16, %s53, [#allocation6]
    $region13: #{tpu_custom_call.1} parent=1 // pred_fallthru
      _
    // Predicated region
    $region14: #{tpu_custom_call.1} parent=1 // pred_check
      _
    $region15: #{tpu_custom_call.1} parent=1 // pred_check_branch
      %57 = sbr.rel (0) target = $region17
    $region16: #{tpu_custom_call.1} parent=1 // pred_region
      %59 = vsyncadd [#allocation9], 0
      %s60 = sshll.u32 %s3, 4
      %s61 = int_to_ptr.hbm [resolvable:$true] %s60
      %s62 = sshll.u32 [#allocation8], 4
      %s63 = int_to_ptr.vmem [resolvable:$true] %s62
      %68 = dma.hbm_to_vmem [thread:$0]  %s61, 2048, %s63, [#allocation9], 64, 64, 4
    $region17: #{tpu_custom_call.1} parent=1 // pred_fallthru
      _
    // Predicated region
    $region18: #{tpu_custom_call.1} parent=1 // pred_check
      _
    $region19: #{tpu_custom_call.1} parent=1 // pred_check_branch
      %70 = sbr.rel (0) target = $region21
    $region20: #{tpu_custom_call.1} parent=1 // pred_region
      _
    $region21: #{tpu_custom_call.1} parent=1 // pred_fallthru
      _
    // Predicated region
    $region22: #{tpu_custom_call.1} parent=1 // pred_check
      _
    $region23: #{tpu_custom_call.1} parent=1 // pred_check_branch
      %72 = sbr.rel (0) target = $region25
    $region24: #{tpu_custom_call.1} parent=1 // pred_region
      %74 = vsyncadd [#allocation9], 0
      %s75 = sshll.u32 %s5, 4
      %s76 = int_to_ptr.hbm [resolvable:$true] %s75
      %s77 = sshll.u32 [#allocation10], 4
      %s78 = int_to_ptr.vmem [resolvable:$true] %s77
      %83 = dma.hbm_to_vmem [thread:$0]  %s76, 2048, %s78, [#allocation9], 64, 64, 4
    $region25: #{tpu_custom_call.1} parent=1 // pred_fallthru
      _
    // Predicated region
    $region26: #{tpu_custom_call.1} parent=1 // pred_check
      _
    $region27: #{tpu_custom_call.1} parent=1 // pred_check_branch
      %85 = sbr.rel (0) target = $region29
    $region28: #{tpu_custom_call.1} parent=1 // pred_region
      _
    $region29: #{tpu_custom_call.1} parent=1 // pred_fallthru
      _
    // Predicated region
    $region30: #{tpu_custom_call.1} parent=1 // pred_check
      _
    $region31: #{tpu_custom_call.1} parent=1 // pred_check_branch
      %87 = sbr.rel (0) target = $region33
    $region32: #{tpu_custom_call.1} parent=1 // pred_region
      %89 = vsyncadd [#allocation12], 0
      %s90 = sshll.u32 %s7, 4
      %s91 = int_to_ptr.hbm [resolvable:$true] %s90
      %s92 = sshll.u32 [#allocation11], 4
      %s93 = int_to_ptr.vmem [resolvable:$true] %s92
      %98 = dma.hbm_to_vmem [thread:$0]  %s91, 1024, %s93, [#allocation12], 64, 64, 4
    $region33: #{tpu_custom_call.1} parent=1 // pred_fallthru
      _
    // Predicated region
    $region34: #{tpu_custom_call.1} parent=1 // pred_check
      _
    $region35: #{tpu_custom_call.1} parent=1 // pred_check_branch
      %100 = sbr.rel (0) target = $region37
    $region36: #{tpu_custom_call.1} parent=1 // pred_region
      _
    $region37: #{tpu_custom_call.1} parent=1 // pred_fallthru
      _
    // Predicated region
    $region38: #{tpu_custom_call.1} parent=1 // pred_check
      _
    $region39: #{tpu_custom_call.1} parent=1 // pred_check_branch
      %102 = sbr.rel (0) target = $region41
    $region40: #{tpu_custom_call.1} parent=1 // pred_region
      %104 = dma.done [#allocation3], 256
    $region41: #{tpu_custom_call.1} parent=1 // pred_fallthru
      _
    // Predicated region
    $region42: #{tpu_custom_call.1} parent=1 // pred_check
      _
    $region43: #{tpu_custom_call.1} parent=1 // pred_check_branch
      %106 = sbr.rel (0) target = $region45
    $region44: #{tpu_custom_call.1} parent=1 // pred_region
      %108 = dma.done [#allocation6], 1024
    $region45: #{tpu_custom_call.1} parent=1 // pred_fallthru
      _
    // Predicated region
    $region46: #{tpu_custom_call.1} parent=1 // pred_check
      _
    $region47: #{tpu_custom_call.1} parent=1 // pred_check_branch
      %110 = sbr.rel (0) target = $region49
    $region48: #{tpu_custom_call.1} parent=1 // pred_region
      %112 = dma.done [#allocation6], 16
    $region49: #{tpu_custom_call.1} parent=1 // pred_fallthru
      _
    // Predicated region
    $region50: #{tpu_custom_call.1} parent=1 // pred_check
      _
    $region51: #{tpu_custom_call.1} parent=1 // pred_check_branch
      %114 = sbr.rel (0) target = $region53
    $region52: #{tpu_custom_call.1} parent=1 // pred_region
      %116 = dma.done [#allocation9], 2048
    $region53: #{tpu_custom_call.1} parent=1 // pred_fallthru
      _
    // Predicated region
    $region54: #{tpu_custom_call.1} parent=1 // pred_check
      _
    $region55: #{tpu_custom_call.1} parent=1 // pred_check_branch
      %118 = sbr.rel (0) target = $region57
    $region56: #{tpu_custom_call.1} parent=1 // pred_region
      %120 = dma.done [#allocation9], 2048
    $region57: #{tpu_custom_call.1} parent=1 // pred_fallthru
      _
    // Predicated region
    $region58: #{tpu_custom_call.1} parent=1 // pred_check
      _
    $region59: #{tpu_custom_call.1} parent=1 // pred_check_branch
      %122 = sbr.rel (0) target = $region61
    $region60: #{tpu_custom_call.1} parent=1 // pred_region
      %124 = dma.done [#allocation12], 1024
    $region61: #{tpu_custom_call.1} parent=1 // pred_fallthru
      _
    %v125 = vld [vmem:[#allocation2] sm:$0xff]
    %v126 = vld [vmem:[#allocation2 + $0x8] sm:$0xff]
    %v127 = vpack.c.bf16 %v126, %v125
    %v128 = vld [vmem:[#allocation5] sm:$0xf]
    %v129 = vld [vmem:[#allocation5 + $0x4] sm:$0xf]
    %v130 = vld [vmem:[#allocation5 + $0x8] sm:$0xf]
    %v131 = vld [vmem:[#allocation5 + $0xc] sm:$0xf]
    %v132 = vld [vmem:[#allocation5 + $0x10] sm:$0xf]
    %v133 = vld [vmem:[#allocation5 + $0x14] sm:$0xf]
    %v134 = vld [vmem:[#allocation5 + $0x18] sm:$0xf]
    %v135 = vld [vmem:[#allocation5 + $0x1c] sm:$0xf]
    %v136 = vld [vmem:[#allocation5 + $0x20] sm:$0xf]
    %v137 = vld [vmem:[#allocation5 + $0x24] sm:$0xf]
    %v138 = vld [vmem:[#allocation5 + $0x28] sm:$0xf]
    %v139 = vld [vmem:[#allocation5 + $0x2c] sm:$0xf]
    %v140 = vld [vmem:[#allocation5 + $0x30] sm:$0xf]
    %v141 = vld [vmem:[#allocation5 + $0x34] sm:$0xf]
    %v142 = vld [vmem:[#allocation5 + $0x38] sm:$0xf]
    %v143 = vld [vmem:[#allocation5 + $0x3c] sm:$0xf]
    %v144 = vld [vmem:[#allocation7] sm:$0x1]
    %v146 = vperm.slane %v144, 0
    %v164 = vunpack.c.l.b16 %v128
    %v165 = vunpack.c.l.b16 %v129
    %v166 = vunpack.c.l.b16 %v130
    %v167 = vunpack.c.l.b16 %v131
    %v168 = vunpack.c.l.b16 %v132
    %v169 = vunpack.c.l.b16 %v133
    %v170 = vunpack.c.l.b16 %v134
    %v171 = vunpack.c.l.b16 %v135
    %v172 = vunpack.c.l.b16 %v136
    %v173 = vunpack.c.l.b16 %v137
    %v174 = vunpack.c.l.b16 %v138
    %v175 = vunpack.c.l.b16 %v139
    %v176 = vunpack.c.l.b16 %v140
    %v177 = vunpack.c.l.b16 %v141
    %v178 = vunpack.c.l.b16 %v142
    %v179 = vunpack.c.l.b16 %v143
    %v180 = vpack.c.b16 %v165, %v164
    %v181 = vpack.c.b16 %v167, %v166
    %v182 = vpack.c.b16 %v169, %v168
    %v183 = vpack.c.b16 %v171, %v170
    %v184 = vpack.c.b16 %v173, %v172
    %v185 = vpack.c.b16 %v175, %v174
    %v186 = vpack.c.b16 %v177, %v176
    %v187 = vpack.c.b16 %v179, %v178
    %196 = vmatpush.bf16.msra.mxu0 %v187
    %197 = vmatpush.bf16.msra.mxu0 %v186
    %198 = vmatpush.bf16.msra.mxu0 %v185
    %199 = vmatpush.bf16.msra.mxu0 %v184
    %200 = vmatpush.bf16.msra.mxu0 %v183
    %201 = vmatpush.bf16.msra.mxu0 %v182
    %202 = vmatpush.bf16.msra.mxu0 %v181
    %203 = vmatpush.bf16.msra.mxu0 %v180
    %204 = vmatmul.bf16.gmra.mxu0 %v127
    %v205 = vpop.f32.mrf.mxu0
    %v206 = vadd.f32 %v146, %v205
    %v207 = vpop.f32.mrf.mxu0
    %v208 = vadd.f32 %v146, %v207
    %209 = vdwg.mxu0
    %v210 = vmax.f32 %v206, 0.0
    %v211 = vmax.f32 %v208, 0.0
    %v212 = vpack.c.bf16 %v211, %v210
    %v213 = vld [vmem:[#allocation8] sm:$0xf]
    %v214 = vld [vmem:[#allocation8 + $0x4] sm:$0xf]
    %v215 = vld [vmem:[#allocation8 + $0x8] sm:$0xf]
    %v216 = vld [vmem:[#allocation8 + $0xc] sm:$0xf]
    %v217 = vld [vmem:[#allocation8 + $0x10] sm:$0xf]
    %v218 = vld [vmem:[#allocation8 + $0x14] sm:$0xf]
    %v219 = vld [vmem:[#allocation8 + $0x18] sm:$0xf]
    %v220 = vld [vmem:[#allocation8 + $0x1c] sm:$0xf]
    %v221 = vld [vmem:[#allocation8 + $0x20] sm:$0xf]
    %v222 = vld [vmem:[#allocation8 + $0x24] sm:$0xf]
    %v223 = vld [vmem:[#allocation8 + $0x28] sm:$0xf]
    %v224 = vld [vmem:[#allocation8 + $0x2c] sm:$0xf]
    %v225 = vld [vmem:[#allocation8 + $0x30] sm:$0xf]
    %v226 = vld [vmem:[#allocation8 + $0x34] sm:$0xf]
    %v227 = vld [vmem:[#allocation8 + $0x38] sm:$0xf]
    %v228 = vld [vmem:[#allocation8 + $0x3c] sm:$0xf]
    %v229 = vld [vmem:[%s4] sm:$0x1]
    %v231 = vperm.slane %v229, 0
    %v249 = vunpack.c.l.b16 %v213
    %v250 = vunpack.c.l.b16 %v214
    %v251 = vunpack.c.l.b16 %v215
    %v252 = vunpack.c.l.b16 %v216
    %v253 = vunpack.c.l.b16 %v217
    %v254 = vunpack.c.l.b16 %v218
    %v255 = vunpack.c.l.b16 %v219
    %v256 = vunpack.c.l.b16 %v220
    %v257 = vunpack.c.l.b16 %v221
    %v258 = vunpack.c.l.b16 %v222
    %v259 = vunpack.c.l.b16 %v223
    %v260 = vunpack.c.l.b16 %v224
    %v261 = vunpack.c.l.b16 %v225
    %v262 = vunpack.c.l.b16 %v226
    %v263 = vunpack.c.l.b16 %v227
    %v264 = vunpack.c.l.b16 %v228
    %v265 = vpack.c.b16 %v250, %v249
    %v266 = vpack.c.b16 %v252, %v251
    %v267 = vpack.c.b16 %v254, %v253
    %v268 = vpack.c.b16 %v256, %v255
    %v269 = vpack.c.b16 %v258, %v257
    %v270 = vpack.c.b16 %v260, %v259
    %v271 = vpack.c.b16 %v262, %v261
    %v272 = vpack.c.b16 %v264, %v263
    %281 = vmatpush.bf16.msra.mxu0 %v272
    %282 = vmatpush.bf16.msra.mxu0 %v271
    %283 = vmatpush.bf16.msra.mxu0 %v270
    %284 = vmatpush.bf16.msra.mxu0 %v269
    %285 = vmatpush.bf16.msra.mxu0 %v268
    %286 = vmatpush.bf16.msra.mxu0 %v267
    %287 = vmatpush.bf16.msra.mxu0 %v266
    %288 = vmatpush.bf16.msra.mxu0 %v265
    %289 = vmatmul.bf16.gmra.mxu0 %v212
    %v290 = vpop.f32.mrf.mxu0
    %v291 = vadd.f32 %v231, %v290
    %v292 = vpop.f32.mrf.mxu0
    %v293 = vadd.f32 %v231, %v292
    %294 = vdwg.mxu0
    %v295 = vmax.f32 %v291, 0.0
    %v296 = vmax.f32 %v293, 0.0
    %v297 = vpack.c.bf16 %v296, %v295
    %v298 = vld [vmem:[#allocation10] sm:$0xf]
    %v299 = vld [vmem:[#allocation10 + $0x4] sm:$0xf]
    %v300 = vld [vmem:[#allocation10 + $0x8] sm:$0xf]
    %v301 = vld [vmem:[#allocation10 + $0xc] sm:$0xf]
    %v302 = vld [vmem:[#allocation10 + $0x10] sm:$0xf]
    %v303 = vld [vmem:[#allocation10 + $0x14] sm:$0xf]
    %v304 = vld [vmem:[#allocation10 + $0x18] sm:$0xf]
    %v305 = vld [vmem:[#allocation10 + $0x1c] sm:$0xf]
    %v306 = vld [vmem:[#allocation10 + $0x20] sm:$0xf]
    %v307 = vld [vmem:[#allocation10 + $0x24] sm:$0xf]
    %v308 = vld [vmem:[#allocation10 + $0x28] sm:$0xf]
    %v309 = vld [vmem:[#allocation10 + $0x2c] sm:$0xf]
    %v310 = vld [vmem:[#allocation10 + $0x30] sm:$0xf]
    %v311 = vld [vmem:[#allocation10 + $0x34] sm:$0xf]
    %v312 = vld [vmem:[#allocation10 + $0x38] sm:$0xf]
    %v313 = vld [vmem:[#allocation10 + $0x3c] sm:$0xf]
    %v314 = vld [vmem:[%s6] sm:$0x1]
    %v316 = vperm.slane %v314, 0
    %v334 = vunpack.c.l.b16 %v298
    %v335 = vunpack.c.l.b16 %v299
    %v336 = vunpack.c.l.b16 %v300
    %v337 = vunpack.c.l.b16 %v301
    %v338 = vunpack.c.l.b16 %v302
    %v339 = vunpack.c.l.b16 %v303
    %v340 = vunpack.c.l.b16 %v304
    %v341 = vunpack.c.l.b16 %v305
    %v342 = vunpack.c.l.b16 %v306
    %v343 = vunpack.c.l.b16 %v307
    %v344 = vunpack.c.l.b16 %v308
    %v345 = vunpack.c.l.b16 %v309
    %v346 = vunpack.c.l.b16 %v310
    %v347 = vunpack.c.l.b16 %v311
    %v348 = vunpack.c.l.b16 %v312
    %v349 = vunpack.c.l.b16 %v313
    %v350 = vpack.c.b16 %v335, %v334
    %v351 = vpack.c.b16 %v337, %v336
    %v352 = vpack.c.b16 %v339, %v338
    %v353 = vpack.c.b16 %v341, %v340
    %v354 = vpack.c.b16 %v343, %v342
    %v355 = vpack.c.b16 %v345, %v344
    %v356 = vpack.c.b16 %v347, %v346
    %v357 = vpack.c.b16 %v349, %v348
    %366 = vmatpush.bf16.msra.mxu0 %v357
    %367 = vmatpush.bf16.msra.mxu0 %v356
    %368 = vmatpush.bf16.msra.mxu0 %v355
    %369 = vmatpush.bf16.msra.mxu0 %v354
    %370 = vmatpush.bf16.msra.mxu0 %v353
    %371 = vmatpush.bf16.msra.mxu0 %v352
    %372 = vmatpush.bf16.msra.mxu0 %v351
    %373 = vmatpush.bf16.msra.mxu0 %v350
    %374 = vmatmul.bf16.gmra.mxu0 %v297
    %v375 = vpop.f32.mrf.mxu0
    %v376 = vadd.f32 %v316, %v375
    %v377 = vpop.f32.mrf.mxu0
    %v378 = vadd.f32 %v316, %v377
    %379 = vdwg.mxu0
    %v380 = vadd.f32 %v210, %v376
    %v381 = vadd.f32 %v211, %v378
    %v382 = vmax.f32 %v380, 0.0
    %v383 = vmax.f32 %v381, 0.0
    %v384 = vpack.c.bf16 %v383, %v382
    %s385 = scalar_lea.vmem [#allocation8], 64
    %v386 = vld [vmem:[%s385] sm:$0xf]
    %v387 = vld [vmem:[%s385 + $0x4] sm:$0xf]
    %v388 = vld [vmem:[%s385 + $0x8] sm:$0xf]
    %v389 = vld [vmem:[%s385 + $0xc] sm:$0xf]
    %v390 = vld [vmem:[%s385 + $0x10] sm:$0xf]
    %v391 = vld [vmem:[%s385 + $0x14] sm:$0xf]
    %v392 = vld [vmem:[%s385 + $0x18] sm:$0xf]
    %v393 = vld [vmem:[%s385 + $0x1c] sm:$0xf]
    %v394 = vld [vmem:[%s385 + $0x20] sm:$0xf]
    %v395 = vld [vmem:[%s385 + $0x24] sm:$0xf]
    %v396 = vld [vmem:[%s385 + $0x28] sm:$0xf]
    %v397 = vld [vmem:[%s385 + $0x2c] sm:$0xf]
    %v398 = vld [vmem:[%s385 + $0x30] sm:$0xf]
    %v399 = vld [vmem:[%s385 + $0x34] sm:$0xf]
    %v400 = vld [vmem:[%s385 + $0x38] sm:$0xf]
    %v401 = vld [vmem:[%s385 + $0x3c] sm:$0xf]
    %s402 = scalar_lea.vmem %s4, 1
    %v403 = vld [vmem:[%s402] sm:$0x1]
    %v405 = vperm.slane %v403, 0
    %v423 = vunpack.c.l.b16 %v386
    %v424 = vunpack.c.l.b16 %v387
    %v425 = vunpack.c.l.b16 %v388
    %v426 = vunpack.c.l.b16 %v389
    %v427 = vunpack.c.l.b16 %v390
    %v428 = vunpack.c.l.b16 %v391
    %v429 = vunpack.c.l.b16 %v392
    %v430 = vunpack.c.l.b16 %v393
    %v431 = vunpack.c.l.b16 %v394
    %v432 = vunpack.c.l.b16 %v395
    %v433 = vunpack.c.l.b16 %v396
    %v434 = vunpack.c.l.b16 %v397
    %v435 = vunpack.c.l.b16 %v398
    %v436 = vunpack.c.l.b16 %v399
    %v437 = vunpack.c.l.b16 %v400
    %v438 = vunpack.c.l.b16 %v401
    %v439 = vpack.c.b16 %v424, %v423
    %v440 = vpack.c.b16 %v426, %v425
    %v441 = vpack.c.b16 %v428, %v427
    %v442 = vpack.c.b16 %v430, %v429
    %v443 = vpack.c.b16 %v432, %v431
    %v444 = vpack.c.b16 %v434, %v433
    %v445 = vpack.c.b16 %v436, %v435
    %v446 = vpack.c.b16 %v438, %v437
    %455 = vmatpush.bf16.msra.mxu0 %v446
    %456 = vmatpush.bf16.msra.mxu0 %v445
    %457 = vmatpush.bf16.msra.mxu0 %v444
    %458 = vmatpush.bf16.msra.mxu0 %v443
    %459 = vmatpush.bf16.msra.mxu0 %v442
    %460 = vmatpush.bf16.msra.mxu0 %v441
    %461 = vmatpush.bf16.msra.mxu0 %v440
    %462 = vmatpush.bf16.msra.mxu0 %v439
    %463 = vmatmul.bf16.gmra.mxu0 %v384
    %v464 = vpop.f32.mrf.mxu0
    %v465 = vadd.f32 %v405, %v464
    %v466 = vpop.f32.mrf.mxu0
    %v467 = vadd.f32 %v405, %v466
    %468 = vdwg.mxu0
    %v469 = vmax.f32 %v465, 0.0
    %v470 = vmax.f32 %v467, 0.0
    %v471 = vpack.c.bf16 %v470, %v469
    %s472 = scalar_lea.vmem [#allocation10], 64
    %v473 = vld [vmem:[%s472] sm:$0xf]
    %v474 = vld [vmem:[%s472 + $0x4] sm:$0xf]
    %v475 = vld [vmem:[%s472 + $0x8] sm:$0xf]
    %v476 = vld [vmem:[%s472 + $0xc] sm:$0xf]
    %v477 = vld [vmem:[%s472 + $0x10] sm:$0xf]
    %v478 = vld [vmem:[%s472 + $0x14] sm:$0xf]
    %v479 = vld [vmem:[%s472 + $0x18] sm:$0xf]
    %v480 = vld [vmem:[%s472 + $0x1c] sm:$0xf]
    %v481 = vld [vmem:[%s472 + $0x20] sm:$0xf]
    %v482 = vld [vmem:[%s472 + $0x24] sm:$0xf]
    %v483 = vld [vmem:[%s472 + $0x28] sm:$0xf]
    %v484 = vld [vmem:[%s472 + $0x2c] sm:$0xf]
    %v485 = vld [vmem:[%s472 + $0x30] sm:$0xf]
    %v486 = vld [vmem:[%s472 + $0x34] sm:$0xf]
    %v487 = vld [vmem:[%s472 + $0x38] sm:$0xf]
    %v488 = vld [vmem:[%s472 + $0x3c] sm:$0xf]
    %s489 = scalar_lea.vmem %s6, 1
    %v490 = vld [vmem:[%s489] sm:$0x1]
    %v492 = vperm.slane %v490, 0
    %v510 = vunpack.c.l.b16 %v473
    %v511 = vunpack.c.l.b16 %v474
    %v512 = vunpack.c.l.b16 %v475
    %v513 = vunpack.c.l.b16 %v476
    %v514 = vunpack.c.l.b16 %v477
    %v515 = vunpack.c.l.b16 %v478
    %v516 = vunpack.c.l.b16 %v479
    %v517 = vunpack.c.l.b16 %v480
    %v518 = vunpack.c.l.b16 %v481
    %v519 = vunpack.c.l.b16 %v482
    %v520 = vunpack.c.l.b16 %v483
    %v521 = vunpack.c.l.b16 %v484
    %v522 = vunpack.c.l.b16 %v485
    %v523 = vunpack.c.l.b16 %v486
    %v524 = vunpack.c.l.b16 %v487
    %v525 = vunpack.c.l.b16 %v488
    %v526 = vpack.c.b16 %v511, %v510
    %v527 = vpack.c.b16 %v513, %v512
    %v528 = vpack.c.b16 %v515, %v514
    %v529 = vpack.c.b16 %v517, %v516
    %v530 = vpack.c.b16 %v519, %v518
    %v531 = vpack.c.b16 %v521, %v520
    %v532 = vpack.c.b16 %v523, %v522
    %v533 = vpack.c.b16 %v525, %v524
    %542 = vmatpush.bf16.msra.mxu0 %v533
    %543 = vmatpush.bf16.msra.mxu0 %v532
    %544 = vmatpush.bf16.msra.mxu0 %v531
    %545 = vmatpush.bf16.msra.mxu0 %v530
    %546 = vmatpush.bf16.msra.mxu0 %v529
    %547 = vmatpush.bf16.msra.mxu0 %v528
    %548 = vmatpush.bf16.msra.mxu0 %v527
    %549 = vmatpush.bf16.msra.mxu0 %v526
    %550 = vmatmul.bf16.gmra.mxu0 %v471
    %v551 = vpop.f32.mrf.mxu0
    %v552 = vadd.f32 %v492, %v551
    %v553 = vpop.f32.mrf.mxu0
    %v554 = vadd.f32 %v492, %v553
    %555 = vdwg.mxu0
    %v556 = vadd.f32 %v382, %v552
    %v557 = vadd.f32 %v383, %v554
    %v558 = vmax.f32 %v556, 0.0
    %v559 = vmax.f32 %v557, 0.0
    %v560 = vpack.c.bf16 %v559, %v558
    %v561 = vld [vmem:[#allocation11] sm:$0xf]
    %v562 = vld [vmem:[#allocation11 + $0x4] sm:$0xf]
    %v563 = vld [vmem:[#allocation11 + $0x8] sm:$0xf]
    %v564 = vld [vmem:[#allocation11 + $0xc] sm:$0xf]
    %v565 = vld [vmem:[#allocation11 + $0x10] sm:$0xf]
    %v566 = vld [vmem:[#allocation11 + $0x14] sm:$0xf]
    %v567 = vld [vmem:[#allocation11 + $0x18] sm:$0xf]
    %v568 = vld [vmem:[#allocation11 + $0x1c] sm:$0xf]
    %v569 = vld [vmem:[#allocation11 + $0x20] sm:$0xf]
    %v570 = vld [vmem:[#allocation11 + $0x24] sm:$0xf]
    %v571 = vld [vmem:[#allocation11 + $0x28] sm:$0xf]
    %v572 = vld [vmem:[#allocation11 + $0x2c] sm:$0xf]
    %v573 = vld [vmem:[#allocation11 + $0x30] sm:$0xf]
    %v574 = vld [vmem:[#allocation11 + $0x34] sm:$0xf]
    %v575 = vld [vmem:[#allocation11 + $0x38] sm:$0xf]
    %v576 = vld [vmem:[#allocation11 + $0x3c] sm:$0xf]
    %v577 = vld [vmem:[%s8] sm:$0x1]
    %v579 = vperm.slane %v577, 0
    %v597 = vunpack.c.l.b16 %v561
    %v598 = vunpack.c.l.b16 %v562
    %v599 = vunpack.c.l.b16 %v563
    %v600 = vunpack.c.l.b16 %v564
    %v601 = vunpack.c.l.b16 %v565
    %v602 = vunpack.c.l.b16 %v566
    %v603 = vunpack.c.l.b16 %v567
    %v604 = vunpack.c.l.b16 %v568
    %v605 = vunpack.c.l.b16 %v569
    %v606 = vunpack.c.l.b16 %v570
    %v607 = vunpack.c.l.b16 %v571
    %v608 = vunpack.c.l.b16 %v572
    %v609 = vunpack.c.l.b16 %v573
    %v610 = vunpack.c.l.b16 %v574
    %v611 = vunpack.c.l.b16 %v575
    %v612 = vunpack.c.l.b16 %v576
    %v613 = vpack.c.b16 %v598, %v597
    %v614 = vpack.c.b16 %v600, %v599
    %v615 = vpack.c.b16 %v602, %v601
    %v616 = vpack.c.b16 %v604, %v603
    %v617 = vpack.c.b16 %v606, %v605
    %v618 = vpack.c.b16 %v608, %v607
    %v619 = vpack.c.b16 %v610, %v609
    %v620 = vpack.c.b16 %v612, %v611
    %629 = vmatpush.bf16.msra.mxu0 %v620
    %630 = vmatpush.bf16.msra.mxu0 %v619
    %631 = vmatpush.bf16.msra.mxu0 %v618
    %632 = vmatpush.bf16.msra.mxu0 %v617
    %633 = vmatpush.bf16.msra.mxu0 %v616
    %634 = vmatpush.bf16.msra.mxu0 %v615
    %635 = vmatpush.bf16.msra.mxu0 %v614
    %636 = vmatpush.bf16.msra.mxu0 %v613
    %637 = vmatmul.bf16.gmra.mxu0 %v560
    %v638 = vpop.f32.mrf.mxu0
    %v639 = vadd.f32 %v579, %v638
    %v640 = vpop.f32.mrf.mxu0
    %v641 = vadd.f32 %v579, %v640
    %642 = vdwg.mxu0
    %643 = vst [vmem:[#allocation13] sm:$0xff] %v639
    %644 = vst [vmem:[#allocation13 + $0x8] sm:$0xff] %v641
    // Predicated region
    $region62: #{tpu_custom_call.1} parent=1 // pred_check
      _
    $region63: #{tpu_custom_call.1} parent=1 // pred_check_branch
      %646 = sbr.rel (0) target = $region65
    $region64: #{tpu_custom_call.1} parent=1 // pred_region
      %648 = vsyncadd [#allocation4], 0
      %s649 = sshll.u32 [#allocation13], 4
      %s650 = int_to_ptr.vmem [resolvable:$true] %s649
      %s651 = sshll.u32 %s9, 4
      %s652 = int_to_ptr.hbm [resolvable:$true] %s651
      %657 = dma.vmem_to_hbm [thread:$0]  %s650, 256, %s652, [#allocation4], 128, 128, 8
    $region65: #{tpu_custom_call.1} parent=1 // pred_fallthru
      _
    // Predicated region
    $region66: #{tpu_custom_call.1} parent=1 // pred_check
      _
    $region67: #{tpu_custom_call.1} parent=1 // pred_check_branch
      %659 = sbr.rel (0) target = $region69
    $region68: #{tpu_custom_call.1} parent=1 // pred_region
      %661 = dma.done [#allocation4], 256
    $region69: #{tpu_custom_call.1} parent=1 // pred_fallthru
      _
    %662 = vsyncpa [#allocation3], 1
    %663 = vsyncpa [#allocation6], 1
    %664 = vsyncpa [#allocation9], 1
    %665 = vsyncpa [#allocation12], 1
    %666 = vsyncpa [#allocation4], 1

</llo_original>
